<compile_context>
chip_gen: v7x
topology: tpu7x:2x2x1
jax: 0.10.0
libtpu: 0.0.40
codegen_flags: <defaults>
</compile_context>

<pallas_src>
import math
import functools

import jax
import jax.numpy as jnp
from jax import lax
from jax.experimental import pallas as pl
from jax.experimental.pallas import tpu as pltpu

MASK_VALUE = -1e30          # large finite negative (NaN-safe) instead of -inf
LOG2E = 1.4426950408889634  # log2(e) — softmax done in base-2 (exp2 trick)
LINEAR_VMEM_LIMIT = 48 * 1024 * 1024   # safe on v5e/v6e (128 MiB) and v7x (64 MiB)


def _tile(dim, pref, align):
    """Largest multiple of `align` that divides `dim` and is <= pref.
    Falls back to the full dimension (always a legal block)."""
    if dim <= pref:
        return dim
    t = (pref // align) * align
    while t >= align:
        if dim % t == 0:
            return t
        t -= align
    return dim


# --------------------------- QKV projection kernel ----------------------------
# Writes the projection output head-major: (B, 3H, S, Dh)  [q heads | k heads | v heads]

def qkv_proj_kernel(x_ref, w_ref, b_ref, o_ref, *, n_groups, dh):
    x = x_ref[0].astype(jnp.bfloat16)                       # (TQ, D)
    y = jnp.dot(x, w_ref[...], preferred_element_type=jnp.float32) + b_ref[...]
    y = y.astype(o_ref.dtype)                               # (TQ, G*Dh) bf16
    for g in range(n_groups):                               # split into heads (static slices)
        o_ref[0, g] = y[:, g * dh:(g + 1) * dh]


def qkv_projection(x, w, b, n_head, *, tq_pref=256, tn_pref=512):
    """x:(B,S,D) @ w:(D,3D) + b:(1,3D) -> (B, 3H, S, Dh) bf16, head-major."""
    B, S, D = x.shape
    H = n_head
    Dh = D // H
    TQ = _tile(S, tq_pref, 8)
    G = max(1, min(3 * H, tn_pref // Dh))                   # heads written per grid step
    while (3 * H) % G:
        G -= 1
    kern = functools.partial(qkv_proj_kernel, n_groups=G, dh=Dh)
    return pl.pallas_call(
        kern,
        out_shape=jax.ShapeDtypeStruct((B, 3 * H, S, Dh), jnp.bfloat16),
        # Weight-stationary ordering: head-group j outermost -> each (D, G*Dh)
        # weight block is fetched exactly once and stays resident across (B, S).
        grid=(3 * H // G, B, S // TQ),
        in_specs=[
            pl.BlockSpec((1, TQ, D), lambda j, bi, i: (bi, i, 0)),
            pl.BlockSpec((D, G * Dh), lambda j, bi, i: (0, j)),
            pl.BlockSpec((1, G * Dh), lambda j, bi, i: (0, j)),
        ],
        out_specs=pl.BlockSpec((1, G, TQ, Dh), lambda j, bi, i: (bi, j, i, 0)),
        compiler_params=pltpu.CompilerParams(
            dimension_semantics=("parallel", "parallel", "parallel"),
            vmem_limit_bytes=LINEAR_VMEM_LIMIT),
    )(x, w, b)


# ----------------------- flash attention core kernel --------------------------
# Grid: (B, H, step) where `step` enumerates only the lower-triangular (qi, ki)
# tiles via scalar-prefetched qi/ki lookup arrays (no causally-dead steps).

def flash_attn_kernel(qi_map_ref, ki_map_ref, q_ref, k_ref, v_ref, o_ref,
                      q_sc, m_sc, l_sc, acc_sc, *, tq, tk, scale_log2e):
    step = pl.program_id(2)
    qi = qi_map_ref[step]
    ki = ki_map_ref[step]
    q_start = qi * tq
    k_start = ki * tk

    @pl.when(ki == 0)
    def _():
        m_sc[...] = jnp.full_like(m_sc, MASK_VALUE)
        l_sc[...] = jnp.zeros_like(l_sc)
        acc_sc[...] = jnp.zeros_like(acc_sc)
        # Fold 1/sqrt(Dh) * log2(e) into q ONCE per q tile (reused every kv step).
        q_sc[...] = (q_ref[0, 0].astype(jnp.float32) * scale_log2e).astype(jnp.bfloat16)

    # Scores in log2 units.
    s = lax.dot_general(q_sc[...], k_ref[0, 0], (((1,), (1,)), ((), ())),
                        preferred_element_type=jnp.float32)         # (tq, tk)

    def update(scores):
        m_prev = m_sc[...]
        m_new = jnp.maximum(m_prev, jnp.max(scores, axis=-1, keepdims=True))
        alpha = jnp.exp2(m_prev - m_new)
        p = jnp.exp2(scores - m_new)
        l_sc[...] = alpha * l_sc[...] + jnp.sum(p, axis=-1, keepdims=True)
        acc_sc[...] = alpha * acc_sc[...] + jnp.dot(
            p.astype(jnp.bfloat16), v_ref[0, 0], preferred_element_type=jnp.float32)
        m_sc[...] = m_new

    # Only tiles straddling the diagonal need the causal mask.
    straddles = k_start + (tk - 1) > q_start

    @pl.when(straddles)
    def _():
        rows = q_start + lax.broadcasted_iota(jnp.int32, (tq, tk), 0)
        cols = k_start + lax.broadcasted_iota(jnp.int32, (tq, tk), 1)
        update(jnp.where(rows >= cols, s, MASK_VALUE))

    @pl.when(jnp.logical_not(straddles))
    def _():
        update(s)

    # Last kv tile for this q tile -> normalize and emit.
    @pl.when(ki == (q_start + tq - 1) // tk)
    def _():
        inv_l = pl.reciprocal(l_sc[...], approx=True)
        o_ref[0, 0] = (acc_sc[...] * inv_l).astype(o_ref.dtype)


def flash_attention(qkv, n_head, *, tq_pref=256, tk_pref=512):
    """qkv: (B, 3H, S, Dh) bf16 head-major -> (B, H, S, Dh) bf16 (causal attention)."""
    B, threeH, S, Dh = qkv.shape
    H = n_head
    TQ = _tile(S, tq_pref, 8)
    TK = _tile(S, tk_pref, 128)
    scale_log2e = LOG2E / math.sqrt(Dh)

    # Flattened lower-triangular (qi, ki) enumeration — dead tiles never exist.
    qi_list, ki_list = [], []
    for qi in range(S // TQ):
        last_ki = ((qi + 1) * TQ - 1) // TK
        for ki in range(last_ki + 1):
            qi_list.append(qi)
            ki_list.append(ki)
    qi_map = jnp.array(qi_list, dtype=jnp.int32)
    ki_map = jnp.array(ki_list, dtype=jnp.int32)
    nsteps = len(qi_list)

    kern = functools.partial(flash_attn_kernel, tq=TQ, tk=TK, scale_log2e=scale_log2e)
    grid_spec = pltpu.PrefetchScalarGridSpec(
        num_scalar_prefetch=2,
        grid=(B, H, nsteps),
        in_specs=[
            pl.BlockSpec((1, 1, TQ, Dh),
                         lambda b, h, s, qi_m, ki_m: (b, h, qi_m[s], 0)),          # q heads
            pl.BlockSpec((1, 1, TK, Dh),
                         lambda b, h, s, qi_m, ki_m: (b, h + H, ki_m[s], 0)),      # k heads
            pl.BlockSpec((1, 1, TK, Dh),
                         lambda b, h, s, qi_m, ki_m: (b, h + 2 * H, ki_m[s], 0)),  # v heads
        ],
        out_specs=pl.BlockSpec((1, 1, TQ, Dh),
                               lambda b, h, s, qi_m, ki_m: (b, h, qi_m[s], 0)),
        scratch_shapes=[
            pltpu.VMEM((TQ, Dh), jnp.bfloat16),   # pre-scaled q (log2 units)
            pltpu.VMEM((TQ, 1), jnp.float32),     # running max m
            pltpu.VMEM((TQ, 1), jnp.float32),     # running denom l
            pltpu.VMEM((TQ, Dh), jnp.float32),    # running output accumulator
        ],
    )
    return pl.pallas_call(
        kern,
        out_shape=jax.ShapeDtypeStruct((B, H, S, Dh), jnp.bfloat16),
        grid_spec=grid_spec,
        compiler_params=pltpu.CompilerParams(
            dimension_semantics=("parallel", "parallel", "arbitrary")),
    )(qi_map, ki_map, qkv, qkv, qkv)


# --------------------------- output projection kernel -------------------------
# Consumes (B, H, S, Dh) directly: the D = H*Dh contraction is realized as an
# innermost reduction grid axis over heads (f32 accumulator scratch).

def out_proj_kernel(o_ref, w_ref, b_ref, y_ref, acc_ref):
    h = pl.program_id(3)

    @pl.when(h == 0)
    def _():
        acc_ref[...] = jnp.zeros_like(acc_ref)

    acc_ref[...] += jnp.dot(o_ref[0, 0], w_ref[0], preferred_element_type=jnp.float32)

    @pl.when(h == pl.num_programs(3) - 1)
    def _():
        y_ref[0] = (acc_ref[...] + b_ref[...]).astype(y_ref.dtype)


def out_projection(o_heads, w, b, *, tq_pref=256, tn_pref=512):
    """o_heads:(B,H,S,Dh) bf16  @ w:(D,D) + b:(1,D) -> (B,S,D) f32."""
    B, H, S, Dh = o_heads.shape
    D = w.shape[1]
    TQ = _tile(S, tq_pref, 8)
    TN = _tile(D, tn_pref, 128)
    w_heads = w.reshape(H, Dh, D)        # free view of (D, D)
    return pl.pallas_call(
        out_proj_kernel,
        out_shape=jax.ShapeDtypeStruct((B, S, D), jnp.float32),
        grid=(B, S // TQ, D // TN, H),
        in_specs=[
            pl.BlockSpec((1, 1, TQ, Dh), lambda bi, i, j, h: (bi, h, i, 0)),
            pl.BlockSpec((1, Dh, TN), lambda bi, i, j, h: (h, 0, j)),
            pl.BlockSpec((1, TN), lambda bi, i, j, h: (0, j)),
        ],
        out_specs=pl.BlockSpec((1, TQ, TN), lambda bi, i, j, h: (bi, i, j)),
        scratch_shapes=[pltpu.VMEM((TQ, TN), jnp.float32)],
        compiler_params=pltpu.CompilerParams(
            dimension_semantics=("parallel", "parallel", "parallel", "arbitrary"),
            vmem_limit_bytes=LINEAR_VMEM_LIMIT),
    )(o_heads, w_heads, b)


# ----------------------------- module forward ---------------------------------

def causal_self_attention(x, params):
    """Forward of CausalSelfAttention (eval mode). x: (B, S, D) float32."""
    H = params["n_head"]
    qkv = qkv_projection(x, params["w_attn"], params["b_attn"], H)   # (B,3H,S,Dh) bf16
    o = flash_attention(qkv, H)                                      # (B,H,S,Dh)  bf16
    # attn_drop / resid_drop are identity in eval mode
    return out_projection(o, params["w_proj"], params["b_proj"])     # (B,S,D) f32


# ------------------------ params (PyTorch Linear-style) ------------------------

def init_params(key, n_embed, n_head):
    D = n_embed
    bound = 1.0 / math.sqrt(D)
    k1, k2, k3, k4 = jax.random.split(key, 4)
    w_attn = jax.random.uniform(k1, (D, 3 * D), jnp.float32, -bound, bound)
    b_attn = jax.random.uniform(k2, (1, 3 * D), jnp.float32, -bound, bound)
    w_proj = jax.random.uniform(k3, (D, D), jnp.float32, -bound, bound)
    b_proj = jax.random.uniform(k4, (1, D), jnp.float32, -bound, bound)
    return dict(
        n_head=n_head,
        w_attn=w_attn.astype(jnp.bfloat16),   # weights stored in bf16
        b_attn=b_attn,
        w_proj=w_proj.astype(jnp.bfloat16),
        b_proj=b_proj,
    )


# ----------------------------- pure-JAX reference ------------------------------

def _ref_forward(x, params):
    B, S, D = x.shape
    H = params["n_head"]
    Dh = D // H
    w_attn = params["w_attn"].astype(jnp.float32)
    w_proj = params["w_proj"].astype(jnp.float32)
    qkv = x @ w_attn + params["b_attn"][0]
    q, k, v = jnp.split(qkv, 3, axis=-1)
    q = q.reshape(B, S, H, Dh).transpose(0, 2, 1, 3)
    k = k.reshape(B, S, H, Dh).transpose(0, 2, 1, 3)
    v = v.reshape(B, S, H, Dh).transpose(0, 2, 1, 3)
    s = jnp.einsum("bhqd,bhkd->bhqk", q, k) / math.sqrt(Dh)
    mask = jnp.tril(jnp.ones((S, S), bool))
    s = jnp.where(mask[None, None], s, -jnp.inf)
    p = jax.nn.softmax(s, axis=-1)
    o = jnp.einsum("bhqk,bhkd->bhqd", p, v).transpose(0, 2, 1, 3).reshape(B, S, D)
    return o @ w_proj + params["b_proj"][0]


# ----------------------------------- main --------------------------------------

if __name__ == "__main__":
    n_embed, n_head, block_size = 32, 4, 16
    B, S = 2, 8

    key = jax.random.PRNGKey(0)
    k_param, k_x = jax.random.split(key)
    params = init_params(k_param, n_embed, n_head)
    x = jax.random.normal(k_x, (B, S, n_embed), dtype=jnp.float32)

    out = causal_self_attention(x, params)
    out = jax.block_until_ready(out)
    assert out.shape == (B, S, n_embed)

    ref = _ref_forward(x, params)
    if not jnp.allclose(out, ref, atol=2e-2, rtol=2e-2):
        err = float(jnp.max(jnp.abs(out - ref)))
        raise AssertionError(
            f"Pallas CausalSelfAttention mismatch vs JAX reference (max |err|={err})")

    print("KERNEL_OK")
</pallas_src>

<mosaic_0001>
module attributes {stable_mosaic.version = 11 : i64} {
  func.func @qkv_proj_kernel(%arg0: i32, %arg1: i32, %arg2: i32, %arg3: memref<1x8x32xf32, #tpu.memory_space<vmem>>, %arg4: memref<32x96xbf16, #tpu.memory_space<vmem>>, %arg5: memref<1x96xf32, #tpu.memory_space<vmem>>, %arg6: memref<1x12x8x8xbf16, #tpu.memory_space<vmem>>) attributes {dimension_semantics = [#tpu.dimension_semantics<parallel>, #tpu.dimension_semantics<parallel>, #tpu.dimension_semantics<parallel>], iteration_bounds = array<i64: 1, 2, 1>, scalar_prefetch = 0 : i64, scratch_operands = 0 : i64, tpu.core_type = #tpu.core_type<tc>, window_params = [{transform_indices = @transform_0, window_bounds = array<i64: 1, 8, 32>}, {transform_indices = @transform_1, window_bounds = array<i64: 32, 96>}, {transform_indices = @transform_2, window_bounds = array<i64: 1, 96>}, {transform_indices = @transform_3, window_bounds = array<i64: 1, 12, 8, 8>}]} {
    %c0 = arith.constant 0 : index
    %c0_0 = arith.constant 0 : index
    %c0_1 = arith.constant 0 : index
    %0 = vector.load %arg3[%c0, %c0_0, %c0_1] : memref<1x8x32xf32, #tpu.memory_space<vmem>>, vector<1x8x32xf32>
    %1 = vector.shape_cast %0 : vector<1x8x32xf32> to vector<8x32xf32>
    %2 = arith.truncf %1 : vector<8x32xf32> to vector<8x32xbf16>
    %c0_2 = arith.constant 0 : index
    %c0_3 = arith.constant 0 : index
    %3 = vector.load %arg4[%c0_2, %c0_3] : memref<32x96xbf16, #tpu.memory_space<vmem>>, vector<32x96xbf16>
    %cst = arith.constant dense<0.000000e+00> : vector<8x96xf32>
    %4 = tpu.matmul %2, %3, %cst {dimension_numbers = #tpu.dot_dimension_numbers<[1], [0], [0], [1], [0, 0, 1, 1], [], []>} : vector<8x32xbf16>, vector<32x96xbf16>, vector<8x96xf32> -> vector<8x96xf32>
    %c0_4 = arith.constant 0 : index
    %c0_5 = arith.constant 0 : index
    %5 = vector.load %arg5[%c0_4, %c0_5] : memref<1x96xf32, #tpu.memory_space<vmem>>, vector<1x96xf32>
    %6 = vector.broadcast %5 : vector<1x96xf32> to vector<8x96xf32>
    %7 = arith.addf %4, %6 : vector<8x96xf32>
    %8 = arith.truncf %7 : vector<8x96xf32> to vector<8x96xbf16>
    %9 = vector.extract_strided_slice %8 {offsets = [0, 0], sizes = [8, 8], strides = [1, 1]} : vector<8x96xbf16> to vector<8x8xbf16>
    %c0_6 = arith.constant 0 : index
    %c0_7 = arith.constant 0 : index
    %c0_8 = arith.constant 0 : index
    %c0_9 = arith.constant 0 : index
    %10 = vector.load %arg6[%c0_6, %c0_7, %c0_8, %c0_9] : memref<1x12x8x8xbf16, #tpu.memory_space<vmem>>, vector<1x1x8x8xbf16>
    %11 = vector.shape_cast %10 : vector<1x1x8x8xbf16> to vector<8x8xbf16>
    %12 = vector.shape_cast %9 : vector<8x8xbf16> to vector<1x1x8x8xbf16>
    tpu.vector_store %arg6[%c0_6, %c0_7, %c0_8, %c0_9], %12 {strides = array<i32>} : memref<1x12x8x8xbf16, #tpu.memory_space<vmem>>, vector<1x1x8x8xbf16>,
    %13 = vector.extract_strided_slice %8 {offsets = [0, 8], sizes = [8, 8], strides = [1, 1]} : vector<8x96xbf16> to vector<8x8xbf16>
    %c0_10 = arith.constant 0 : index
    %c1 = arith.constant 1 : index
    %c0_11 = arith.constant 0 : index
    %c0_12 = arith.constant 0 : index
    %14 = vector.load %arg6[%c0_10, %c1, %c0_11, %c0_12] : memref<1x12x8x8xbf16, #tpu.memory_space<vmem>>, vector<1x1x8x8xbf16>
    %15 = vector.shape_cast %14 : vector<1x1x8x8xbf16> to vector<8x8xbf16>
    %16 = vector.shape_cast %13 : vector<8x8xbf16> to vector<1x1x8x8xbf16>
    tpu.vector_store %arg6[%c0_10, %c1, %c0_11, %c0_12], %16 {strides = array<i32>} : memref<1x12x8x8xbf16, #tpu.memory_space<vmem>>, vector<1x1x8x8xbf16>,
    %17 = vector.extract_strided_slice %8 {offsets = [0, 16], sizes = [8, 8], strides = [1, 1]} : vector<8x96xbf16> to vector<8x8xbf16>
    %c0_13 = arith.constant 0 : index
    %c2 = arith.constant 2 : index
    %c0_14 = arith.constant 0 : index
    %c0_15 = arith.constant 0 : index
    %18 = vector.load %arg6[%c0_13, %c2, %c0_14, %c0_15] : memref<1x12x8x8xbf16, #tpu.memory_space<vmem>>, vector<1x1x8x8xbf16>
    %19 = vector.shape_cast %18 : vector<1x1x8x8xbf16> to vector<8x8xbf16>
    %20 = vector.shape_cast %17 : vector<8x8xbf16> to vector<1x1x8x8xbf16>
    tpu.vector_store %arg6[%c0_13, %c2, %c0_14, %c0_15], %20 {strides = array<i32>} : memref<1x12x8x8xbf16, #tpu.memory_space<vmem>>, vector<1x1x8x8xbf16>,
    %21 = vector.extract_strided_slice %8 {offsets = [0, 24], sizes = [8, 8], strides = [1, 1]} : vector<8x96xbf16> to vector<8x8xbf16>
    %c0_16 = arith.constant 0 : index
    %c3 = arith.constant 3 : index
    %c0_17 = arith.constant 0 : index
    %c0_18 = arith.constant 0 : index
    %22 = vector.load %arg6[%c0_16, %c3, %c0_17, %c0_18] : memref<1x12x8x8xbf16, #tpu.memory_space<vmem>>, vector<1x1x8x8xbf16>
    %23 = vector.shape_cast %22 : vector<1x1x8x8xbf16> to vector<8x8xbf16>
    %24 = vector.shape_cast %21 : vector<8x8xbf16> to vector<1x1x8x8xbf16>
    tpu.vector_store %arg6[%c0_16, %c3, %c0_17, %c0_18], %24 {strides = array<i32>} : memref<1x12x8x8xbf16, #tpu.memory_space<vmem>>, vector<1x1x8x8xbf16>,
    %25 = vector.extract_strided_slice %8 {offsets = [0, 32], sizes = [8, 8], strides = [1, 1]} : vector<8x96xbf16> to vector<8x8xbf16>
    %c0_19 = arith.constant 0 : index
    %c4 = arith.constant 4 : index
    %c0_20 = arith.constant 0 : index
    %c0_21 = arith.constant 0 : index
    %26 = vector.load %arg6[%c0_19, %c4, %c0_20, %c0_21] : memref<1x12x8x8xbf16, #tpu.memory_space<vmem>>, vector<1x1x8x8xbf16>
    %27 = vector.shape_cast %26 : vector<1x1x8x8xbf16> to vector<8x8xbf16>
    %28 = vector.shape_cast %25 : vector<8x8xbf16> to vector<1x1x8x8xbf16>
    tpu.vector_store %arg6[%c0_19, %c4, %c0_20, %c0_21], %28 {strides = array<i32>} : memref<1x12x8x8xbf16, #tpu.memory_space<vmem>>, vector<1x1x8x8xbf16>,
    %29 = vector.extract_strided_slice %8 {offsets = [0, 40], sizes = [8, 8], strides = [1, 1]} : vector<8x96xbf16> to vector<8x8xbf16>
    %c0_22 = arith.constant 0 : index
    %c5 = arith.constant 5 : index
    %c0_23 = arith.constant 0 : index
    %c0_24 = arith.constant 0 : index
    %30 = vector.load %arg6[%c0_22, %c5, %c0_23, %c0_24] : memref<1x12x8x8xbf16, #tpu.memory_space<vmem>>, vector<1x1x8x8xbf16>
    %31 = vector.shape_cast %30 : vector<1x1x8x8xbf16> to vector<8x8xbf16>
    %32 = vector.shape_cast %29 : vector<8x8xbf16> to vector<1x1x8x8xbf16>
    tpu.vector_store %arg6[%c0_22, %c5, %c0_23, %c0_24], %32 {strides = array<i32>} : memref<1x12x8x8xbf16, #tpu.memory_space<vmem>>, vector<1x1x8x8xbf16>,
    %33 = vector.extract_strided_slice %8 {offsets = [0, 48], sizes = [8, 8], strides = [1, 1]} : vector<8x96xbf16> to vector<8x8xbf16>
    %c0_25 = arith.constant 0 : index
    %c6 = arith.constant 6 : index
    %c0_26 = arith.constant 0 : index
    %c0_27 = arith.constant 0 : index
    %34 = vector.load %arg6[%c0_25, %c6, %c0_26, %c0_27] : memref<1x12x8x8xbf16, #tpu.memory_space<vmem>>, vector<1x1x8x8xbf16>
    %35 = vector.shape_cast %34 : vector<1x1x8x8xbf16> to vector<8x8xbf16>
    %36 = vector.shape_cast %33 : vector<8x8xbf16> to vector<1x1x8x8xbf16>
    tpu.vector_store %arg6[%c0_25, %c6, %c0_26, %c0_27], %36 {strides = array<i32>} : memref<1x12x8x8xbf16, #tpu.memory_space<vmem>>, vector<1x1x8x8xbf16>,
    %37 = vector.extract_strided_slice %8 {offsets = [0, 56], sizes = [8, 8], strides = [1, 1]} : vector<8x96xbf16> to vector<8x8xbf16>
    %c0_28 = arith.constant 0 : index
    %c7 = arith.constant 7 : index
    %c0_29 = arith.constant 0 : index
    %c0_30 = arith.constant 0 : index
    %38 = vector.load %arg6[%c0_28, %c7, %c0_29, %c0_30] : memref<1x12x8x8xbf16, #tpu.memory_space<vmem>>, vector<1x1x8x8xbf16>
    %39 = vector.shape_cast %38 : vector<1x1x8x8xbf16> to vector<8x8xbf16>
    %40 = vector.shape_cast %37 : vector<8x8xbf16> to vector<1x1x8x8xbf16>
    tpu.vector_store %arg6[%c0_28, %c7, %c0_29, %c0_30], %40 {strides = array<i32>} : memref<1x12x8x8xbf16, #tpu.memory_space<vmem>>, vector<1x1x8x8xbf16>,
    %41 = vector.extract_strided_slice %8 {offsets = [0, 64], sizes = [8, 8], strides = [1, 1]} : vector<8x96xbf16> to vector<8x8xbf16>
    %c0_31 = arith.constant 0 : index
    %c8 = arith.constant 8 : index
    %c0_32 = arith.constant 0 : index
    %c0_33 = arith.constant 0 : index
    %42 = vector.load %arg6[%c0_31, %c8, %c0_32, %c0_33] : memref<1x12x8x8xbf16, #tpu.memory_space<vmem>>, vector<1x1x8x8xbf16>
    %43 = vector.shape_cast %42 : vector<1x1x8x8xbf16> to vector<8x8xbf16>
    %44 = vector.shape_cast %41 : vector<8x8xbf16> to vector<1x1x8x8xbf16>
    tpu.vector_store %arg6[%c0_31, %c8, %c0_32, %c0_33], %44 {strides = array<i32>} : memref<1x12x8x8xbf16, #tpu.memory_space<vmem>>, vector<1x1x8x8xbf16>,
    %45 = vector.extract_strided_slice %8 {offsets = [0, 72], sizes = [8, 8], strides = [1, 1]} : vector<8x96xbf16> to vector<8x8xbf16>
    %c0_34 = arith.constant 0 : index
    %c9 = arith.constant 9 : index
    %c0_35 = arith.constant 0 : index
    %c0_36 = arith.constant 0 : index
    %46 = vector.load %arg6[%c0_34, %c9, %c0_35, %c0_36] : memref<1x12x8x8xbf16, #tpu.memory_space<vmem>>, vector<1x1x8x8xbf16>
    %47 = vector.shape_cast %46 : vector<1x1x8x8xbf16> to vector<8x8xbf16>
    %48 = vector.shape_cast %45 : vector<8x8xbf16> to vector<1x1x8x8xbf16>
    tpu.vector_store %arg6[%c0_34, %c9, %c0_35, %c0_36], %48 {strides = array<i32>} : memref<1x12x8x8xbf16, #tpu.memory_space<vmem>>, vector<1x1x8x8xbf16>,
    %49 = vector.extract_strided_slice %8 {offsets = [0, 80], sizes = [8, 8], strides = [1, 1]} : vector<8x96xbf16> to vector<8x8xbf16>
    %c0_37 = arith.constant 0 : index
    %c10 = arith.constant 10 : index
    %c0_38 = arith.constant 0 : index
    %c0_39 = arith.constant 0 : index
    %50 = vector.load %arg6[%c0_37, %c10, %c0_38, %c0_39] : memref<1x12x8x8xbf16, #tpu.memory_space<vmem>>, vector<1x1x8x8xbf16>
    %51 = vector.shape_cast %50 : vector<1x1x8x8xbf16> to vector<8x8xbf16>
    %52 = vector.shape_cast %49 : vector<8x8xbf16> to vector<1x1x8x8xbf16>
    tpu.vector_store %arg6[%c0_37, %c10, %c0_38, %c0_39], %52 {strides = array<i32>} : memref<1x12x8x8xbf16, #tpu.memory_space<vmem>>, vector<1x1x8x8xbf16>,
    %53 = vector.extract_strided_slice %8 {offsets = [0, 88], sizes = [8, 8], strides = [1, 1]} : vector<8x96xbf16> to vector<8x8xbf16>
    %c0_40 = arith.constant 0 : index
    %c11 = arith.constant 11 : index
    %c0_41 = arith.constant 0 : index
    %c0_42 = arith.constant 0 : index
    %54 = vector.load %arg6[%c0_40, %c11, %c0_41, %c0_42] : memref<1x12x8x8xbf16, #tpu.memory_space<vmem>>, vector<1x1x8x8xbf16>
    %55 = vector.shape_cast %54 : vector<1x1x8x8xbf16> to vector<8x8xbf16>
    %56 = vector.shape_cast %53 : vector<8x8xbf16> to vector<1x1x8x8xbf16>
    tpu.vector_store %arg6[%c0_40, %c11, %c0_41, %c0_42], %56 {strides = array<i32>} : memref<1x12x8x8xbf16, #tpu.memory_space<vmem>>, vector<1x1x8x8xbf16>,
    return
  }
  func.func @transform_0(%arg0: i32, %arg1: i32, %arg2: i32) -> (i32, i32, i32) {
    %c0_i32 = arith.constant 0 : i32
    %c0_i32_0 = arith.constant 0 : i32
    return %arg1, %arg2, %c0_i32 : i32, i32, i32
  }
  func.func @transform_1(%arg0: i32, %arg1: i32, %arg2: i32) -> (i32, i32) {
    %c0_i32 = arith.constant 0 : i32
    %c0_i32_0 = arith.constant 0 : i32
    return %c0_i32, %arg0 : i32, i32
  }
  func.func @transform_2(%arg0: i32, %arg1: i32, %arg2: i32) -> (i32, i32) {
    %c0_i32 = arith.constant 0 : i32
    %c0_i32_0 = arith.constant 0 : i32
    return %c0_i32, %arg0 : i32, i32
  }
  func.func @transform_3(%arg0: i32, %arg1: i32, %arg2: i32) -> (i32, i32, i32, i32) {
    %c0_i32 = arith.constant 0 : i32
    %c0_i32_0 = arith.constant 0 : i32
    return %arg1, %arg0, %arg2, %c0_i32 : i32, i32, i32, i32
  }
}

</mosaic_0001>

<llo_original>
// kernel: tpu_custom_call.1
$region0: #{tpu_custom_call.1}
  #allocation0 [shape = 'u32[]', space=smem, size = 0x4, offset = 0x4, fixed_abs, tag = 'smem constant byte address 0x4 - core index']
  #allocation1 [shape = 'u32[144,128]{1,0:T(1,128)}', space=vmem, size = 0x12000, scoped, tag = 'internal scratch']
  %s0 = inlined_call_operand.hbm [shape: f32[2,8,32], index: 0, kind: input, shape index: {}]
  %s1 = inlined_call_operand.hbm [shape: bf16[32,96], index: 1, kind: input, shape index: {}]
  %s2 = inlined_call_operand.vmem [shape: f32[1,96], index: 2, kind: input, shape index: {}]
  %s3 = inlined_call_operand.vmem [shape: bf16[2,12,8,8], index: 3, kind: output, shape index: {}]
  %s4 = sld [smem:[#allocation0]]
  $region53: #{tpu_custom_call.1} parent=0
    _
  %s6 = ssub.s32 1, %s4
  %s7 = scalar_select 0, %s6, %s4
  $region1: #{tpu_custom_call.1} parent=0
    #allocation2 [shape = 'u8[8192]{0}', space=vmem, size = 0x2000, scoped, tag = 'input window, operand 0']
    #allocation3 [shape = 's32[2]{0}', space=sflag, size = 0x8, scoped, tag = 'scoped memory for tpu_custom_call.1']
    #allocation4 [shape = 'u8[8192]{0}', space=vmem, size = 0x2000, scoped, tag = 'input window, operand 1, single buffered']
    #allocation5 [shape = 's32[1]{0}', space=sflag, size = 0x4, scoped, tag = 'scoped memory for tpu_custom_call.1']
    %8 = vsyncpa [#allocation3], 0
    %s9 = scalar_lea.sflag [#allocation3], 1
    %10 = vsyncpa %s9, 0
    %11 = vsyncpa [#allocation5], 0
    loop: start=0, step=1, limit=4
    $region2: #{tpu_custom_call.1} parent=1 // loop_pre_header
      _
    $region3: #{tpu_custom_call.1} parent=1 // loop_header
      %s13 = sphi 0, %s17
      %p14 = scmp.ge.s32.totalorder %s13, 4
      %s20 = sphi 0, %s39
      %s21 = sphi 0, %s35
      %s22 = sphi 0, %s31
      %s23 = sphi 0, %s20
      %s24 = sphi 0, %s21
      %s25 = sphi 0, %s22
      %s26 = sphi 0, %s23
      %s27 = sphi 0, %s24
      %s28 = sphi 0, %s25
      %s44 = sphi 0, %s46
      %s47 = sphi 0, %s44
      %s48 = sphi 0, %s47
      %s64 = sphi 0, %s48
      %s70 = sphi 0, %s72
      %s73 = sphi 0, %s70
      %s74 = sphi 0, %s73
      %s90 = sphi 0, %s74
      %s96 = sphi 0, %s98
      %s99 = sphi 0, %s96
      %s100 = sphi 0, %s99
      %s116 = sphi 0, %s100
      %s126 = sphi 0, %s128
      %s129 = sphi 0, %s126
      %s130 = sphi 0, %s129
      %s146 = sphi 0, %s130
    $region4: #{tpu_custom_call.1} parent=1 // loop_header_branch
      %16 = sbr.rel (%p14) target = $region8
    $region5: #{tpu_custom_call.1} parent=1 // loop_body
      %s18 = ssub.s32 %s13, 1
      %s19 = ssub.s32 %s13, 2
      %s29 = sadd.s32 1, %s22
      %p30 = scmp.ge.s32.totalorder %s29, 1
      %s31 = scalar_select %p30, 0, %s29
      %s32 = sadd.s32 1, %s21
      %s33 = scalar_select %p30, %s32, %s21
      %p34 = scmp.ge.s32.totalorder %s33, 2
      %s35 = scalar_select %p34, 0, %s33
      %s36 = sadd.s32 1, %s20
      %s37 = scalar_select %p34, %s36, %s20
      %p38 = scmp.ge.s32.totalorder %s37, 1
      %s39 = scalar_select %p38, 0, %s37
      %s40 = ssub.s32 %s21, %s35
      %s41 = ssub.s32 %s22, %s31
      %s42 = sor.u32 %s40, %s41
      %p43 = scmp.eq.s32.totalorder %s42, 0
      %s45 = sadd.s32 %s44, 1
      %s46 = scalar_select %p43, %s44, %s45
      %p49 = pneg %p43
      %p50 = scmp.eq.s32.totalorder %s13, 1
      %p51 = por %p49, %p50
      %p52 = scmp.ne.s32.totalorder %s44, %s47
      %p53 = scmp.eq.s32.totalorder %s13, 0
      %p54 = por %p52, %p53
      %p55 = scmp.ne.s32.totalorder %s44, %s47
      %p56 = scmp.eq.s32.totalorder %s18, 1
      %p57 = por %p55, %p56
      %p58 = scmp.ne.s32.totalorder %s47, %s48
      %p59 = scmp.eq.s32.totalorder %s18, 0
      %p60 = por %p58, %p59
      %p61 = scmp.ne.s32.totalorder %s47, %s48
      %p62 = scmp.eq.s32.totalorder %s19, 1
      %p63 = por %p61, %p62
      %p65 = scmp.ne.s32.totalorder %s48, %s64
      %p66 = scmp.eq.s32.totalorder %s19, 0
      %p67 = por %p65, %p66
      %s68 = ssub.s32 %s20, %s39
      %p69 = scmp.eq.s32.totalorder %s68, 0
      %s71 = sadd.s32 %s70, 1
      %s72 = scalar_select %p69, %s70, %s71
      %p75 = pneg %p69
      %p76 = scmp.eq.s32.totalorder %s13, 1
      %p77 = por %p75, %p76
      %p78 = scmp.ne.s32.totalorder %s70, %s73
      %p79 = scmp.eq.s32.totalorder %s13, 0
      %p80 = por %p78, %p79
      %p81 = scmp.ne.s32.totalorder %s70, %s73
      %p82 = scmp.eq.s32.totalorder %s18, 1
      %p83 = por %p81, %p82
      %p84 = scmp.ne.s32.totalorder %s73, %s74
      %p85 = scmp.eq.s32.totalorder %s18, 0
      %p86 = por %p84, %p85
      %p87 = scmp.ne.s32.totalorder %s73, %s74
      %p88 = scmp.eq.s32.totalorder %s19, 1
      %p89 = por %p87, %p88
      %p91 = scmp.ne.s32.totalorder %s74, %s90
      %p92 = scmp.eq.s32.totalorder %s19, 0
      %p93 = por %p91, %p92
      %s94 = ssub.s32 %s20, %s39
      %p95 = scmp.eq.s32.totalorder %s94, 0
      %s97 = sadd.s32 %s96, 1
      %s98 = scalar_select %p95, %s96, %s97
      %p101 = pneg %p95
      %p102 = scmp.eq.s32.totalorder %s13, 1
      %p103 = por %p101, %p102
      %p104 = scmp.ne.s32.totalorder %s96, %s99
      %p105 = scmp.eq.s32.totalorder %s13, 0
      %p106 = por %p104, %p105
      %p107 = scmp.ne.s32.totalorder %s96, %s99
      %p108 = scmp.eq.s32.totalorder %s18, 1
      %p109 = por %p107, %p108
      %p110 = scmp.ne.s32.totalorder %s99, %s100
      %p111 = scmp.eq.s32.totalorder %s18, 0
      %p112 = por %p110, %p111
      %p113 = scmp.ne.s32.totalorder %s99, %s100
      %p114 = scmp.eq.s32.totalorder %s19, 1
      %p115 = por %p113, %p114
      %p117 = scmp.ne.s32.totalorder %s100, %s116
      %p118 = scmp.eq.s32.totalorder %s19, 0
      %p119 = por %p117, %p118
      %s120 = ssub.s32 %s21, %s35
      %s121 = ssub.s32 %s20, %s39
      %s122 = sor.u32 %s120, %s121
      %s123 = ssub.s32 %s22, %s31
      %s124 = sor.u32 %s122, %s123
      %p125 = scmp.eq.s32.totalorder %s124, 0
      %s127 = sadd.s32 %s126, 1
      %s128 = scalar_select %p125, %s126, %s127
      %p131 = pneg %p125
      %p132 = scmp.eq.s32.totalorder %s13, 1
      %p133 = por %p131, %p132
      %p134 = scmp.ne.s32.totalorder %s126, %s129
      %p135 = scmp.eq.s32.totalorder %s13, 0
      %p136 = por %p134, %p135
      %p137 = scmp.ne.s32.totalorder %s126, %s129
      %p138 = scmp.eq.s32.totalorder %s18, 1
      %p139 = por %p137, %p138
      %p140 = scmp.ne.s32.totalorder %s129, %s130
      %p141 = scmp.eq.s32.totalorder %s18, 0
      %p142 = por %p140, %p141
      %p143 = scmp.ne.s32.totalorder %s129, %s130
      %p144 = scmp.eq.s32.totalorder %s19, 1
      %p145 = por %p143, %p144
      %p147 = scmp.ne.s32.totalorder %s130, %s146
      %p148 = scmp.eq.s32.totalorder %s19, 0
      %p149 = por %p147, %p148
      %p150 = scmp.le.s32.totalorder 1, %s13
      %p151 = scmp.lt.s32.totalorder %s13, 3
      %p152 = pnand %p150, %p151
      %p153 = pneg %p152
      // Predicated region
      $region9: #{tpu_custom_call.1} parent=5 // pred_check
        _
      $region10: #{tpu_custom_call.1} parent=5 // pred_check_branch
        %155 = sbr.rel (%p152) target = $region12
      $region11: #{tpu_custom_call.1} parent=5 // pred_region
        %s156 = ssub.s32 %s13, 1
        // Predicated region
        $region13: #{tpu_custom_call.1} parent=11 // pred_check
          %p157 = pneg %p86
        $region14: #{tpu_custom_call.1} parent=11 // pred_check_branch
          %159 = sbr.rel (%p157) target = $region16
        $region15: #{tpu_custom_call.1} parent=11 // pred_region
          %s161 = ssub.s32 256, 256
          %162 = vsyncadd [#allocation5], %s161
          %s163 = smul.addr %s23, 64
          %s164 = scalar_lea.hbm %s1, %s163
          %s165 = sshll.u32 [#allocation4], 4
          %s166 = int_to_ptr.vmem [resolvable:$true] %s165
          %171 = dma.hbm_to_vmem [thread:$0]  %s164, 256, %s166, [#allocation5], 64, 64, 4
        $region16: #{tpu_custom_call.1} parent=11 // pred_fallthru
          _
        // Predicated region
        $region17: #{tpu_custom_call.1} parent=11 // pred_check
          %p172 = pneg %p112
        $region18: #{tpu_custom_call.1} parent=11 // pred_check_branch
          %174 = sbr.rel (%p172) target = $region20
        $region19: #{tpu_custom_call.1} parent=11 // pred_region
          %p175 = scmp.lt.s32.totalorder %s23, 0
          %s176 = scalar_select %p175, %s23, 0
          %s177 = scalar_lea.vmem %s2, %s176
        $region20: #{tpu_custom_call.1} parent=11 // pred_fallthru
          _
      $region12: #{tpu_custom_call.1} parent=5 // pred_fallthru
        _
      %p178 = scmp.lt.s32.totalorder %s13, 2
      // Predicated region
      $region21: #{tpu_custom_call.1} parent=5 // pred_check
        %p179 = pneg %p178
      $region22: #{tpu_custom_call.1} parent=5 // pred_check_branch
        %181 = sbr.rel (%p179) target = $region24
      $region23: #{tpu_custom_call.1} parent=5 // pred_region
        // Predicated region
        $region25: #{tpu_custom_call.1} parent=23 // pred_check
          %p182 = pneg %p54
        $region26: #{tpu_custom_call.1} parent=23 // pred_check_branch
          %184 = sbr.rel (%p182) target = $region28
        $region27: #{tpu_custom_call.1} parent=23 // pred_region
          %s185 = sand.u32 %s44, 1
          %s186 = scalar_lea.sflag [#allocation3], %s185
          %s187 = sand.u32 %s44, 1
          %s188 = smul.addr %s187, 8
          %s189 = scalar_lea.vmem [#allocation2], %s188
          %s191 = ssub.s32 128, 128
          %192 = vsyncadd %s186, %s191
          %s193 = sadd.s32 %s22, %s21
          %s194 = smul.addr %s193, 128
          %s195 = scalar_lea.hbm %s0, %s194
          %s197 = sshll.u32 %s189, 4
          %s198 = int_to_ptr.vmem [resolvable:$true] %s197
          %200 = dma.hbm_to_vmem [thread:$0]  %s195, 128, %s198, %s186
        $region28: #{tpu_custom_call.1} parent=23 // pred_fallthru
          _
      $region24: #{tpu_custom_call.1} parent=5 // pred_fallthru
        _
      %p201 = scmp.le.s32.totalorder 1, %s13
      %p202 = scmp.lt.s32.totalorder %s13, 3
      %p203 = pnand %p201, %p202
      %p204 = pneg %p203
      // Predicated region
      $region29: #{tpu_custom_call.1} parent=5 // pred_check
        _
      $region30: #{tpu_custom_call.1} parent=5 // pred_check_branch
        %206 = sbr.rel (%p203) target = $region32
      $region31: #{tpu_custom_call.1} parent=5 // pred_region
        %s207 = ssub.s32 %s13, 1
        %s208 = sand.u32 %s47, 1
        %s209 = scalar_lea.sflag [#allocation3], %s208
        %s210 = sand.u32 %s47, 1
        %s211 = smul.addr %s210, 8
        %s212 = scalar_lea.vmem [#allocation2], %s211
        // Predicated region
        $region33: #{tpu_custom_call.1} parent=31 // pred_check
          %p213 = pneg %p60
        $region34: #{tpu_custom_call.1} parent=31 // pred_check_branch
          %215 = sbr.rel (%p213) target = $region36
        $region35: #{tpu_custom_call.1} parent=31 // pred_region
          %216 = dma.done %s209, 128
        $region36: #{tpu_custom_call.1} parent=31 // pred_fallthru
          _
        // Predicated region
        $region37: #{tpu_custom_call.1} parent=31 // pred_check
          %p217 = pneg %p86
        $region38: #{tpu_custom_call.1} parent=31 // pred_check_branch
          %219 = sbr.rel (%p217) target = $region40
        $region39: #{tpu_custom_call.1} parent=31 // pred_region
          %220 = dma.done [#allocation5], 256
        $region40: #{tpu_custom_call.1} parent=31 // pred_fallthru
          _
        %s221 = sand.u32 %s47, 1
        %s222 = scalar_lea.sflag [#allocation3], %s221
        %s223 = sand.u32 %s47, 1
        %s224 = smul.addr %s223, 8
        %s225 = scalar_lea.vmem [#allocation2], %s224
        %p226 = pneg %p60
        %p227 = pneg %p57
        %p228 = pneg %p86
        %p229 = pneg %p83
        %p230 = scmp.lt.s32.totalorder %s23, 0
        %s231 = scalar_select %p230, %s23, 0
        %s232 = scalar_lea.vmem %s2, %s231
        %p233 = pneg %p112
        %p234 = pneg %p109
        %p235 = pneg %p142
        %p236 = pneg %p139
        %s237 = smul.u32 12, %s23
        %p238 = scmp.lt.s32.totalorder %s24, 1
        %s239 = scalar_select %p238, %s24, 1
        %p240 = scmp.lt.s32.totalorder %s237, 11
        %s241 = scalar_select %p240, %s237, 11
        %p242 = scmp.lt.s32.totalorder %s25, 0
        %s243 = scalar_select %p242, %s25, 0
        %s244 = sadd.s32 %s243, %s241
        %s245 = smul.addr %s239, 12
        %s246 = sadd.s32 %s244, %s245
        %s247 = smul.addr %s246, 4
        %s248 = scalar_lea.vmem %s3, %s247
        %p249 = scmp.lt.s32.totalorder %s23, 0
        %s250 = scalar_select %p249, %s23, 0
        %s251 = scalar_lea.vmem %s2, %s250
        %s252 = smul.u32 12, %s23
        %p253 = scmp.lt.s32.totalorder %s24, 1
        %s254 = scalar_select %p253, %s24, 1
        %p255 = scmp.lt.s32.totalorder %s252, 11
        %s256 = scalar_select %p255, %s252, 11
        %p257 = scmp.lt.s32.totalorder %s25, 0
        %s258 = scalar_select %p257, %s25, 0
        %s259 = sadd.s32 %s258, %s256
        %s260 = smul.addr %s254, 12
        %s261 = sadd.s32 %s259, %s260
        %s262 = smul.addr %s261, 4
        %s263 = scalar_lea.vmem %s3, %s262
        %s264 = smul.u32 12, %s23
        %v266 = vld [vmem:[%s212] sm:$0xff]
        %v267 = vpack.c.bf16 %v266, %v266
        %v268 = vld [vmem:[#allocation4] sm:$0xf]
        %v269 = vld [vmem:[#allocation4 + $0x4] sm:$0xf]
        %v270 = vld [vmem:[#allocation4 + $0x8] sm:$0xf]
        %v271 = vld [vmem:[#allocation4 + $0xc] sm:$0xf]
        %v272 = vld [vmem:[%s251] sm:$0x1]
        %v274 = vlaneseq
        %v275 = vshrl.u32 %v274, 7
        %v276 = vsub.s32 0, %v275
        %v277 = vrot.slane %v272, %v276
        %v283 = vunpack.c.l.b16 %v268
        %v284 = vunpack.c.l.b16 %v269
        %v285 = vunpack.c.l.b16 %v270
        %v286 = vunpack.c.l.b16 %v271
        %v287 = vpack.c.b16 %v284, %v283
        %v288 = vpack.c.b16 %v286, %v285
        %vm291 = vcmask 261120
        %v293 = vsel %vm291, %v267, 0
        %295 = vmatprep.subr.bf16.mxu0 0
        %296 = vmatpush1.bf16.msra.mxu0 %v287
        %297 = vmatprep.subr.bf16.mxu0 0
        %298 = vmatpush1.bf16.msra.mxu0 %v288
        %299 = vmatprep.subr.bf16.mxu0 0
        %300 = vmatpush1.bf16.msra.mxu0 0
        %301 = vmatprep.subr.bf16.mxu0 0
        %302 = vmatpush1.bf16.msra.mxu0 0
        %303 = vmatprep.subr.bf16.mxu0 0
        %304 = vmatpush1.bf16.msra.mxu0 0
        %305 = vmatprep.subr.bf16.mxu0 0
        %306 = vmatpush1.bf16.msra.mxu0 0
        %307 = vmatprep.subr.bf16.mxu0 0
        %308 = vmatpush1.bf16.msra.mxu0 0
        %309 = vmatprep.subr.bf16.mxu0 0
        %310 = vmatpush1.bf16.msra.mxu0 0
        %311 = vmatprep.subr.bf16.mxu0 0
        %312 = vmatpush1.bf16.msra.mxu0 0
        %313 = vmatprep.subr.bf16.mxu0 0
        %314 = vmatpush1.bf16.msra.mxu0 0
        %315 = vmatprep.subr.bf16.mxu0 0
        %316 = vmatpush1.bf16.msra.mxu0 0
        %317 = vmatprep.subr.bf16.mxu0 0
        %318 = vmatpush1.bf16.msra.mxu0 0
        %319 = vmatprep.subr.bf16.mxu0 0
        %320 = vmatpush1.bf16.msra.mxu0 0
        %321 = vmatprep.subr.bf16.mxu0 0
        %322 = vmatpush1.bf16.msra.mxu0 0
        %323 = vmatprep.subr.bf16.mxu0 0
        %324 = vmatpush1.bf16.msra.mxu0 0
        %325 = vmatprep.subr.bf16.mxu0 0
        %326 = vmatpush1.bf16.msra.mxu0 0
        %327 = vmatprep.mubr.bf16.mxu0 0
        %328 = vmatmul.mubr.bf16.gmra.mrb[0].mxu0 %v293
        %v329 = vpop.f32.mrb[0].mxu0
        %v330 = vadd.f32 %v277, %v329
        %v331 = vpop.f32.mrb[0].mxu0
        %v332 = vpop.f32.mrb[0].mxu0
        %v333 = vpop.f32.mrb[0].mxu0
        %334 = vdwg.mxu0
        %v335 = vpack.c.bf16 %v330, %v330
        %vm336 = vcmask 60416
        %337 = vst.msk [vmem:[%s263] sm:$0xf] %vm336, %v335
        %v339 = vunpack.c.l.b16 %v335
        %v340 = vpack.c.b16 %v339, %v339
        %341 = vrot.lane.b32.xlu0 %v340, 120
        %v342 = vpop.permute.xlu0 %341
        %s344 = scalar_lea.vmem %s263, 4
        %345 = vst.msk [vmem:[%s344] sm:$0xf] %vm336, %v342
        %346 = vrot.lane.b32.xlu0 %v340, 112
        %v347 = vpop.permute.xlu0 %346
        %s349 = scalar_lea.vmem %s263, 8
        %350 = vst.msk [vmem:[%s349] sm:$0xf] %vm336, %v347
        %351 = vrot.lane.b32.xlu0 %v340, 104
        %v352 = vpop.permute.xlu0 %351
        %s354 = scalar_lea.vmem %s263, 12
        %355 = vst.msk [vmem:[%s354] sm:$0xf] %vm336, %v352
        %356 = vrot.lane.b32.xlu0 %v340, 96
        %v357 = vpop.permute.xlu0 %356
        %s359 = scalar_lea.vmem %s263, 16
        %360 = vst.msk [vmem:[%s359] sm:$0xf] %vm336, %v357
        %361 = vrot.lane.b32.xlu0 %v340, 88
        %v362 = vpop.permute.xlu0 %361
        %s364 = scalar_lea.vmem %s263, 20
        %365 = vst.msk [vmem:[%s364] sm:$0xf] %vm336, %v362
        %366 = vrot.lane.b32.xlu0 %v340, 80
        %v367 = vpop.permute.xlu0 %366
        %s369 = scalar_lea.vmem %s263, 24
        %370 = vst.msk [vmem:[%s369] sm:$0xf] %vm336, %v367
        %371 = vrot.lane.b32.xlu0 %v340, 72
        %v372 = vpop.permute.xlu0 %371
        %s374 = scalar_lea.vmem %s263, 28
        %375 = vst.msk [vmem:[%s374] sm:$0xf] %vm336, %v372
        %376 = vrot.lane.b32.xlu0 %v340, 64
        %v377 = vpop.permute.xlu0 %376
        %s379 = scalar_lea.vmem %s263, 32
        %380 = vst.msk [vmem:[%s379] sm:$0xf] %vm336, %v377
        %381 = vrot.lane.b32.xlu0 %v340, 56
        %v382 = vpop.permute.xlu0 %381
        %s384 = scalar_lea.vmem %s263, 36
        %385 = vst.msk [vmem:[%s384] sm:$0xf] %vm336, %v382
        %386 = vrot.lane.b32.xlu0 %v340, 48
        %v387 = vpop.permute.xlu0 %386
        %s389 = scalar_lea.vmem %s263, 40
        %390 = vst.msk [vmem:[%s389] sm:$0xf] %vm336, %v387
        %391 = vrot.lane.b32.xlu0 %v340, 40
        %v392 = vpop.permute.xlu0 %391
        %s394 = scalar_lea.vmem %s263, 44
        %395 = vst.msk [vmem:[%s394] sm:$0xf] %vm336, %v392
        %s396 = smul.u32 12, %s23
        %p397 = scmp.lt.s32.totalorder %s24, 1
        %s398 = scalar_select %p397, %s24, 1
        %p399 = scmp.lt.s32.totalorder %s396, 11
        %s400 = scalar_select %p399, %s396, 11
        %p401 = scmp.lt.s32.totalorder %s25, 0
        %s402 = scalar_select %p401, %s25, 0
        %s403 = sadd.s32 %s402, %s400
        %s404 = smul.addr %s398, 12
        %s405 = sadd.s32 %s403, %s404
        %s406 = smul.addr %s405, 4
        %s407 = scalar_lea.vmem %s3, %s406
        // Predicated region
        $region41: #{tpu_custom_call.1} parent=31 // pred_check
          %p408 = pneg %p139
        $region42: #{tpu_custom_call.1} parent=31 // pred_check_branch
          %410 = sbr.rel (%p408) target = $region44
        $region43: #{tpu_custom_call.1} parent=31 // pred_region
          %s411 = smul.u32 12, %s23
        $region44: #{tpu_custom_call.1} parent=31 // pred_fallthru
          _
      $region32: #{tpu_custom_call.1} parent=5 // pred_fallthru
        _
      %p412 = scmp.le.s32.totalorder 2, %s13
      // Predicated region
      $region45: #{tpu_custom_call.1} parent=5 // pred_check
        %p413 = pneg %p412
      $region46: #{tpu_custom_call.1} parent=5 // pred_check_branch
        %415 = sbr.rel (%p413) target = $region48
      $region47: #{tpu_custom_call.1} parent=5 // pred_region
        %s416 = ssub.s32 %s13, 2
        // Predicated region
        $region49: #{tpu_custom_call.1} parent=47 // pred_check
          %p417 = pneg %p145
        $region50: #{tpu_custom_call.1} parent=47 // pred_check_branch
          %419 = sbr.rel (%p417) target = $region52
        $region51: #{tpu_custom_call.1} parent=47 // pred_region
          %s420 = smul.u32 12, %s26
          %p421 = scmp.lt.s32.totalorder %s27, 1
          %s422 = scalar_select %p421, %s27, 1
          %p423 = scmp.lt.s32.totalorder %s420, 11
          %s424 = scalar_select %p423, %s420, 11
          %p425 = scmp.lt.s32.totalorder %s28, 0
          %s426 = scalar_select %p425, %s28, 0
          %s427 = sadd.s32 %s426, %s424
          %s428 = smul.addr %s422, 12
          %s429 = sadd.s32 %s427, %s428
          %s430 = smul.addr %s429, 4
          %s431 = scalar_lea.vmem %s3, %s430
        $region52: #{tpu_custom_call.1} parent=47 // pred_fallthru
          _
      $region48: #{tpu_custom_call.1} parent=5 // pred_fallthru
        _
    $region6: #{tpu_custom_call.1} parent=1 // loop_footer
      %s17 = sadd.s32 1, %s13
    $region7: #{tpu_custom_call.1} parent=1 // loop_footer_branch
      %12 = sbr.rel target = $region3
    $region8: #{tpu_custom_call.1} parent=1 // loop_exit
      _
    %432 = vsyncpa [#allocation3], 1
    %s433 = scalar_lea.sflag [#allocation3], 1
    %434 = vsyncpa %s433, 1
    %435 = vsyncpa [#allocation5], 1

</llo_original>
